<compile_context>
chip_gen: v7x
topology: tpu7x:2x2x1
jax: 0.10.0
libtpu: 0.0.40
codegen_flags: <defaults>
</compile_context>

<pallas_src>
import numpy as np

import jax
import jax.numpy as jnp
from jax.experimental import pallas as pl
from jax.experimental.pallas import tpu as pltpu


# ---------------------------------------------------------------------------
# Kernel
# ---------------------------------------------------------------------------

def _make_fftnet_kernel(n_streams, shift, tt):
    """Kernel body for one (batch, time-tile) grid step.

    Ref order:
      per stream i : x_main_i (1, C_i, TT), x_overlap_i (1, C_i, SOV)
      per stream i : w_l_i (C_out, C_i),    w_r_i (C_out, C_i)
      b_cat (C_out, 1) f32, wo (C_out, C_out), bo (C_out, 1) f32
      out (1, C_out, TT)
    """

    def kernel(*refs):
        x_refs = refs[:2 * n_streams]
        w_refs = refs[2 * n_streams:4 * n_streams]
        bcat_ref, wo_ref, bo_ref, out_ref = refs[4 * n_streams:]

        acc_l = None    # sum_i W_l_i @ x_i[tile]            (C_out, TT)  f32
        acc_rm = None   # sum_i W_r_i @ x_i[tile]            (C_out, TT)  f32
        acc_ro = None   # sum_i W_r_i @ x_i[tile overlap]    (C_out, SOV) f32
        for i in range(n_streams):
            w_l = w_refs[2 * i][...]
            w_r = w_refs[2 * i + 1][...]
            # Activations arrive in their native dtype; cast per tile on the
            # VPU (free here) so the MXU runs the bf16 path when weights are
            # bf16, without forcing a wrapper-side cast copy.
            xm = x_refs[2 * i][0].astype(w_l.dtype)          # (C_i, TT)
            xo = x_refs[2 * i + 1][0].astype(w_l.dtype)      # (C_i, SOV)
            d_l = jnp.dot(w_l, xm, preferred_element_type=jnp.float32)
            d_rm = jnp.dot(w_r, xm, preferred_element_type=jnp.float32)
            d_ro = jnp.dot(w_r, xo, preferred_element_type=jnp.float32)
            acc_l = d_l if acc_l is None else acc_l + d_l
            acc_rm = d_rm if acc_rm is None else acc_rm + d_rm
            acc_ro = d_ro if acc_ro is None else acc_ro + d_ro

        # Shift-aligned right contribution: columns [shift, shift+TT) of the
        # (TT + SOV)-wide right projection.  The unaligned static lane slice
        # lowers to an XLU rotate/copy — cheap, this kernel is HBM-bound.
        r_wide = jnp.concatenate([acc_rm, acc_ro], axis=-1)  # (C_out, TT+SOV)
        s = acc_l + r_wide[:, shift:shift + tt] + bcat_ref[...]
        z = jnp.maximum(s, 0.0)
        out = jnp.maximum(
            jnp.dot(wo_ref[...], z.astype(wo_ref.dtype),
                    preferred_element_type=jnp.float32)
            + bo_ref[...] + s,                               # residual
            0.0)
        out_ref[0] = out.astype(out_ref.dtype)

    return kernel


# ---------------------------------------------------------------------------
# Wrapper
# ---------------------------------------------------------------------------

def _cdiv(a, b):
    return -(-a // b)


def _round_up(a, m):
    return _cdiv(a, m) * m


_VMEM_TILE_TARGET = 40 * 1024 * 1024   # shrink the tile until we fit this
_VMEM_LIMIT_CAP = 48 * 1024 * 1024     # safe on v7x (64 MiB physical VMEM)


def _vmem_estimate(chans, c_out, tt, sov, act_bytes, w_bytes, out_bytes):
    """Rough per-core VMEM footprint: double-buffered tiles + weights + temps."""
    act = 2 * sum(c * (tt + sov) * ab for c, ab in zip(chans, act_bytes))
    outb = 2 * c_out * tt * out_bytes
    wts = 2 * w_bytes * (sum(2 * c_out * c for c in chans) + c_out * c_out)
    bias = 2 * 4 * 2 * c_out
    tmp = 4 * (4 * c_out * (tt + sov) + 3 * c_out * tt)    # f32 intermediates
    return act + outb + wts + bias + tmp


def _fftnet_forward(streams, wo, bo, shift, *, compute_dtype=jnp.bfloat16,
                    out_dtype=None, time_tile=1024):
    """Generic FFTNetBlock forward over any number of input streams.

    streams: list of (x, w_l, b_l, w_r, b_r), x of shape (B, C_i, T_i) with
             T_i >= T := streams[0][0].shape[-1].  Streams after the first use
             only their last T columns (PyTorch `h = h[:, :, -x1.size(-1):]`).
    Weights are (C_out, C_i); biases are (C_out, 1) columns.
    Returns (B, C_out, T - shift) in out_dtype (default: compute_dtype).
    """
    if shift <= 0:
        raise ValueError("shift must be > 0 (matches PyTorch x[:, :, :-shift])")
    x1 = streams[0][0]
    B, _, T = x1.shape
    L = T - shift
    if L <= 0:
        raise ValueError("time dimension must be larger than shift")
    C_out = wo.shape[0]
    out_dtype = compute_dtype if out_dtype is None else out_dtype

    # ---- align streams: each stream uses its LAST T columns ----------------
    xs, chans, w_args = [], [], []
    b_cat = jnp.zeros((C_out, 1), jnp.float32)
    for (x, w_l, b_l, w_r, b_r) in streams:
        off = x.shape[-1] - T
        if off < 0:
            raise ValueError("conditioning stream shorter than x1")
        if off:
            x = x[:, :, off:]         # copies only h (small); x1/x2 untouched
        xs.append(x)
        chans.append(x.shape[1])
        w_args += [w_l.astype(compute_dtype), w_r.astype(compute_dtype)]
        b_cat = b_cat + b_l.astype(jnp.float32) + b_r.astype(jnp.float32)
    wo_c = wo.astype(compute_dtype)
    bo_c = bo.astype(jnp.float32)

    # ---- time tiling: TT a lane-dense multiple of SOV (both x128) ----------
    SOV = _round_up(shift, 128)            # overlap columns read per tile
    TT = _round_up(max(int(time_tile), SOV), SOV)
    TT = min(TT, _round_up(L, SOV))        # don't tile wider than the problem
    if B == 1 and _cdiv(L, TT) < 2 and TT > SOV:
        # v7x megacore: keep at least 2 grid steps so both TCs get work.
        TT = max(SOV, _round_up(_cdiv(L, 2), SOV))

    act_bytes = [np.dtype(x.dtype).itemsize for x in xs]
    w_bytes = np.dtype(compute_dtype).itemsize
    out_bytes = np.dtype(out_dtype).itemsize
    while True:
        need = _vmem_estimate(chans, C_out, TT, SOV, act_bytes, w_bytes,
                              out_bytes)
        if need <= _VMEM_TILE_TARGET or TT <= SOV:
            break
        new_tt = max(SOV, _round_up(TT // 2, SOV))
        if new_tt == TT:
            break
        TT = new_tt
    vmem_limit = int(min(max(2 * need, 32 * 1024 * 1024), _VMEM_LIMIT_CAP))
    vmem_limit = max(vmem_limit, need + (2 << 20))

    n_t = _cdiv(L, TT)
    ratio = TT // SOV
    max_ov_idx = _cdiv(T, SOV) - 1   # last (at least partially) valid block

    def main_map(b, t):
        return (b, 0, t)

    def overlap_map(b, t):
        # Block immediately after the current time tile.  For the final tile
        # the index is clamped in-bounds; its contents then only feed output
        # columns >= L, which Pallas masks out of the partial output block.
        return (b, 0, jnp.minimum((t + 1) * ratio, max_ov_idx))

    in_specs, args = [], []
    for x, c in zip(xs, chans):
        in_specs += [pl.BlockSpec((1, c, TT), main_map),
                     pl.BlockSpec((1, c, SOV), overlap_map)]
        args += [x, x]                 # same un-copied array, two views
    for c in chans:                    # grid-invariant weights stay resident
        in_specs += [pl.BlockSpec((C_out, c), lambda b, t: (0, 0)),
                     pl.BlockSpec((C_out, c), lambda b, t: (0, 0))]
    in_specs += [pl.BlockSpec((C_out, 1), lambda b, t: (0, 0)),
                 pl.BlockSpec((C_out, C_out), lambda b, t: (0, 0)),
                 pl.BlockSpec((C_out, 1), lambda b, t: (0, 0))]
    args += w_args + [b_cat, wo_c, bo_c]

    cost = pl.CostEstimate(
        flops=int(2 * B * L * C_out * (2 * sum(chans) + C_out)),
        transcendentals=0,
        bytes_accessed=int(
            B * sum(c * (T + n_t * SOV) * ab for c, ab in zip(chans, act_bytes))
            + B * C_out * L * out_bytes
            + w_bytes * (sum(2 * C_out * c for c in chans) + C_out * C_out)
            + 2 * C_out * 4),
    )

    out = pl.pallas_call(
        _make_fftnet_kernel(len(streams), shift, TT),
        out_shape=jax.ShapeDtypeStruct((B, C_out, L), out_dtype),
        grid=(B, n_t),
        in_specs=in_specs,
        out_specs=pl.BlockSpec((1, C_out, TT), main_map),
        compiler_params=pltpu.CompilerParams(
            dimension_semantics=("parallel", "parallel"),
            vmem_limit_bytes=vmem_limit),
        cost_estimate=cost,
    )(*args)
    return out


def fftnet_block_base(x1, params, shift, **kw):
    """x2=None, h=None branch. x1: (B, C_in, T) -> (B, C_out, T - shift)."""
    return _fftnet_forward(
        [(x1, params["w1l"], params["b1l"], params["w1r"], params["b1r"])],
        params["wo"], params["bo"], shift, **kw)


def fftnet_block_cond(x1, h, params, shift, **kw):
    """x2=None, h given branch. h: (B, C_lc, Th >= T)."""
    return _fftnet_forward(
        [(x1, params["w1l"], params["b1l"], params["w1r"], params["b1r"]),
         (h, params["whl"], params["bhl"], params["whr"], params["bhr"])],
        params["wo"], params["bo"], shift, **kw)


def fftnet_block_band_cond(x1, x2, h, params, shift, **kw):
    """x2 given AND h given branch (first_band_input=True with conditioning)."""
    return _fftnet_forward(
        [(x1, params["w1l"], params["b1l"], params["w1r"], params["b1r"]),
         (x2, params["w2l"], params["b2l"], params["w2r"], params["b2r"]),
         (h, params["whl"], params["bhl"], params["whr"], params["bhr"])],
        params["wo"], params["bo"], shift, **kw)


# TODO(synk): the (x2 given, h=None) branch of the reference PyTorch forward
# references undefined names x_l/x_r and would raise NameError; not implemented.


# ---------------------------------------------------------------------------
# NumPy float64 reference (precision-unambiguous correctness check)
# ---------------------------------------------------------------------------

def _np_conv1x1(x, w, b):
    return np.einsum("oi,bil->bol", w, x) + b[None, :, :]


def ref_forward(streams_np, wo, bo, shift):
    T = streams_np[0][0].shape[-1]
    L = T - shift
    s = 0.0
    for (x, w_l, b_l, w_r, b_r) in streams_np:
        x = x[:, :, x.shape[-1] - T:]
        s = (s + _np_conv1x1(x[:, :, :L], w_l, b_l)
             + _np_conv1x1(x[:, :, shift:shift + L], w_r, b_r))
    z = np.maximum(s, 0.0)
    return np.maximum(_np_conv1x1(z, wo, bo) + s, 0.0)


# ---------------------------------------------------------------------------
# Main
# ---------------------------------------------------------------------------

if __name__ == "__main__":
    key = jax.random.PRNGKey(0)
    keys = jax.random.split(key, 24)

    def mk(k, shape, scale=0.1):
        return (scale * jax.random.normal(k, shape)).astype(jnp.float32)

    def np64(a):
        return np.asarray(jax.device_get(a), dtype=np.float64)

    # ---- small shapes (single tile, exercises partial-block masking) -------
    B, C_IN, C_OUT, C_LC, T, SHIFT = 2, 4, 8, 4, 16, 2

    params = {
        "w1l": mk(keys[0], (C_OUT, C_IN)), "b1l": mk(keys[1], (C_OUT, 1)),
        "w1r": mk(keys[2], (C_OUT, C_IN)), "b1r": mk(keys[3], (C_OUT, 1)),
        "whl": mk(keys[4], (C_OUT, C_LC)), "bhl": mk(keys[5], (C_OUT, 1)),
        "whr": mk(keys[6], (C_OUT, C_LC)), "bhr": mk(keys[7], (C_OUT, 1)),
        "w2l": mk(keys[8], (C_OUT, C_IN)), "b2l": mk(keys[9], (C_OUT, 1)),
        "w2r": mk(keys[10], (C_OUT, C_IN)), "b2r": mk(keys[11], (C_OUT, 1)),
        "wo": mk(keys[12], (C_OUT, C_OUT)), "bo": mk(keys[13], (C_OUT, 1)),
    }
    x1 = jax.random.normal(keys[14], (B, C_IN, T), dtype=jnp.float32)
    x2 = jax.random.normal(keys[15], (B, C_IN, T), dtype=jnp.float32)
    h = jax.random.normal(keys[16], (B, C_LC, T + 4), dtype=jnp.float32)

    def stream_np(x, wl, bl, wr, br, p=params):
        return (np64(x), np64(p[wl]), np64(p[bl]), np64(p[wr]), np64(p[br]))

    wo64, bo64 = np64(params["wo"]), np64(params["bo"])
    L = T - SHIFT

    # ---- unconditioned path (x2=None, h=None), f32 --------------------------
    out_base = jax.block_until_ready(
        fftnet_block_base(x1, params, SHIFT, compute_dtype=jnp.float32))
    ref_base = ref_forward([stream_np(x1, "w1l", "b1l", "w1r", "b1r")],
                           wo64, bo64, SHIFT)
    assert out_base.shape == (B, C_OUT, L)
    assert np.allclose(np64(out_base), ref_base, atol=5e-3, rtol=5e-3), \
        "base (f32) mismatch"

    # ---- locally-conditioned path (x2=None, h given), f32 -------------------
    out_cond = jax.block_until_ready(
        fftnet_block_cond(x1, h, params, SHIFT, compute_dtype=jnp.float32))
    ref_cond = ref_forward([stream_np(x1, "w1l", "b1l", "w1r", "b1r"),
                            stream_np(h, "whl", "bhl", "whr", "bhr")],
                           wo64, bo64, SHIFT)
    assert out_cond.shape == (B, C_OUT, L)
    assert np.allclose(np64(out_cond), ref_cond, atol=5e-3, rtol=5e-3), \
        "cond (f32) mismatch"

    # ---- band + conditioning path (x2 given, h given), f32 ------------------
    out_band = jax.block_until_ready(
        fftnet_block_band_cond(x1, x2, h, params, SHIFT,
                               compute_dtype=jnp.float32))
    ref_band = ref_forward([stream_np(x1, "w1l", "b1l", "w1r", "b1r"),
                            stream_np(x2, "w2l", "b2l", "w2r", "b2r"),
                            stream_np(h, "whl", "bhl", "whr", "bhr")],
                           wo64, bo64, SHIFT)
    assert out_band.shape == (B, C_OUT, L)
    assert np.allclose(np64(out_band), ref_band, atol=5e-3, rtol=5e-3), \
        "band-cond (f32) mismatch"

    # ---- default path: bf16 weights / MXU / output, f32 accumulate ----------
    out_bf16 = jax.block_until_ready(fftnet_block_cond(x1, h, params, SHIFT))
    assert out_bf16.shape == (B, C_OUT, L)
    assert out_bf16.dtype == jnp.bfloat16
    assert np.allclose(np64(out_bf16), ref_cond, atol=5e-2, rtol=5e-2), \
        "cond (bf16) mismatch"

    # ---- multi-tile path: several time tiles + cross-tile overlap reads -----
    B2, C_IN2, C_LC2, T2, SHIFT2 = 1, 4, 8, 300, 5
    k2 = jax.random.split(keys[17], 12)
    p2 = {
        "w1l": mk(k2[0], (C_OUT, C_IN2)), "b1l": mk(k2[1], (C_OUT, 1)),
        "w1r": mk(k2[2], (C_OUT, C_IN2)), "b1r": mk(k2[3], (C_OUT, 1)),
        "whl": mk(k2[4], (C_OUT, C_LC2)), "bhl": mk(k2[5], (C_OUT, 1)),
        "whr": mk(k2[6], (C_OUT, C_LC2)), "bhr": mk(k2[7], (C_OUT, 1)),
        "wo": mk(k2[8], (C_OUT, C_OUT)), "bo": mk(k2[9], (C_OUT, 1)),
    }
    x1b = jax.random.normal(k2[10], (B2, C_IN2, T2), dtype=jnp.float32)
    hb = jax.random.normal(k2[11], (B2, C_LC2, T2 + 7), dtype=jnp.float32)
    out_mt = jax.block_until_ready(
        fftnet_block_cond(x1b, hb, p2, SHIFT2, compute_dtype=jnp.float32,
                          time_tile=128))
    ref_mt = ref_forward(
        [stream_np(x1b, "w1l", "b1l", "w1r", "b1r", p=p2),
         stream_np(hb, "whl", "bhl", "whr", "bhr", p=p2)],
        np64(p2["wo"]), np64(p2["bo"]), SHIFT2)
    assert out_mt.shape == (B2, C_OUT, T2 - SHIFT2)
    assert np.allclose(np64(out_mt), ref_mt, atol=5e-3, rtol=5e-3), \
        "multi-tile (f32) mismatch"

    print("KERNEL_OK")
</pallas_src>

<mosaic_0001>
module attributes {stable_mosaic.version = 11 : i64} {
  func.func @kernel(%arg0: i32, %arg1: i32, %arg2: memref<1x4x128xf32, #tpu.memory_space<vmem>>, %arg3: memref<1x4x128xf32, #tpu.memory_space<vmem>>, %arg4: memref<8x4xf32, #tpu.memory_space<vmem>>, %arg5: memref<8x4xf32, #tpu.memory_space<vmem>>, %arg6: memref<8x1xf32, #tpu.memory_space<vmem>>, %arg7: memref<8x8xf32, #tpu.memory_space<vmem>>, %arg8: memref<8x1xf32, #tpu.memory_space<vmem>>, %arg9: memref<1x8x128xf32, #tpu.memory_space<vmem>>) attributes {dimension_semantics = [#tpu.dimension_semantics<parallel>, #tpu.dimension_semantics<parallel>], iteration_bounds = array<i64: 2, 1>, scalar_prefetch = 0 : i64, scratch_operands = 0 : i64, tpu.core_type = #tpu.core_type<tc>, window_params = [{transform_indices = @transform_0, window_bounds = array<i64: 1, 4, 128>}, {transform_indices = @transform_1, window_bounds = array<i64: 1, 4, 128>}, {pipeline_mode = #tpu.pipeline_mode<synchronous>, transform_indices = @transform_2, window_bounds = array<i64: 8, 4>}, {pipeline_mode = #tpu.pipeline_mode<synchronous>, transform_indices = @transform_3, window_bounds = array<i64: 8, 4>}, {pipeline_mode = #tpu.pipeline_mode<synchronous>, transform_indices = @transform_4, window_bounds = array<i64: 8, 1>}, {pipeline_mode = #tpu.pipeline_mode<synchronous>, transform_indices = @transform_5, window_bounds = array<i64: 8, 8>}, {pipeline_mode = #tpu.pipeline_mode<synchronous>, transform_indices = @transform_6, window_bounds = array<i64: 8, 1>}, {transform_indices = @transform_7, window_bounds = array<i64: 1, 8, 128>}]} {
    %c0 = arith.constant 0 : index
    %c0_0 = arith.constant 0 : index
    %0 = vector.load %arg4[%c0, %c0_0] : memref<8x4xf32, #tpu.memory_space<vmem>>, vector<8x4xf32>
    %c0_1 = arith.constant 0 : index
    %c0_2 = arith.constant 0 : index
    %1 = vector.load %arg5[%c0_1, %c0_2] : memref<8x4xf32, #tpu.memory_space<vmem>>, vector<8x4xf32>
    %c0_3 = arith.constant 0 : index
    %c0_4 = arith.constant 0 : index
    %c0_5 = arith.constant 0 : index
    %2 = vector.load %arg2[%c0_3, %c0_4, %c0_5] : memref<1x4x128xf32, #tpu.memory_space<vmem>>, vector<1x4x128xf32>
    %3 = vector.shape_cast %2 : vector<1x4x128xf32> to vector<4x128xf32>
    %c0_6 = arith.constant 0 : index
    %c0_7 = arith.constant 0 : index
    %c0_8 = arith.constant 0 : index
    %4 = vector.load %arg3[%c0_6, %c0_7, %c0_8] : memref<1x4x128xf32, #tpu.memory_space<vmem>>, vector<1x4x128xf32>
    %5 = vector.shape_cast %4 : vector<1x4x128xf32> to vector<4x128xf32>
    %cst = arith.constant dense<0.000000e+00> : vector<8x128xf32>
    %6 = tpu.matmul %0, %3, %cst {dimension_numbers = #tpu.dot_dimension_numbers<[1], [0], [0], [1], [0, 0, 1, 1], [], []>} : vector<8x4xf32>, vector<4x128xf32>, vector<8x128xf32> -> vector<8x128xf32>
    %cst_9 = arith.constant dense<0.000000e+00> : vector<8x128xf32>
    %7 = tpu.matmul %1, %3, %cst_9 {dimension_numbers = #tpu.dot_dimension_numbers<[1], [0], [0], [1], [0, 0, 1, 1], [], []>} : vector<8x4xf32>, vector<4x128xf32>, vector<8x128xf32> -> vector<8x128xf32>
    %cst_10 = arith.constant dense<0.000000e+00> : vector<8x128xf32>
    %8 = tpu.matmul %1, %5, %cst_10 {dimension_numbers = #tpu.dot_dimension_numbers<[1], [0], [0], [1], [0, 0, 1, 1], [], []>} : vector<8x4xf32>, vector<4x128xf32>, vector<8x128xf32> -> vector<8x128xf32>
    %9 = tpu.concatenate %7, %8 in 1 : vector<8x128xf32>, vector<8x128xf32> -> vector<8x256xf32>
    %10 = vector.extract_strided_slice %9 {offsets = [0, 2], sizes = [8, 128], strides = [1, 1]} : vector<8x256xf32> to vector<8x128xf32>
    %11 = arith.addf %6, %10 : vector<8x128xf32>
    %c0_11 = arith.constant 0 : index
    %c0_12 = arith.constant 0 : index
    %12 = vector.load %arg6[%c0_11, %c0_12] : memref<8x1xf32, #tpu.memory_space<vmem>>, vector<8x1xf32>
    %13 = vector.broadcast %12 : vector<8x1xf32> to vector<8x128xf32>
    %14 = arith.addf %11, %13 : vector<8x128xf32>
    %cst_13 = arith.constant 0.000000e+00 : f32
    %15 = vector.broadcast %cst_13 : f32 to vector<8x128xf32>
    %16 = arith.maximumf %14, %15 : vector<8x128xf32>
    %c0_14 = arith.constant 0 : index
    %c0_15 = arith.constant 0 : index
    %17 = vector.load %arg7[%c0_14, %c0_15] : memref<8x8xf32, #tpu.memory_space<vmem>>, vector<8x8xf32>
    %cst_16 = arith.constant dense<0.000000e+00> : vector<8x128xf32>
    %18 = tpu.matmul %17, %16, %cst_16 {dimension_numbers = #tpu.dot_dimension_numbers<[1], [0], [0], [1], [0, 0, 1, 1], [], []>} : vector<8x8xf32>, vector<8x128xf32>, vector<8x128xf32> -> vector<8x128xf32>
    %c0_17 = arith.constant 0 : index
    %c0_18 = arith.constant 0 : index
    %19 = vector.load %arg8[%c0_17, %c0_18] : memref<8x1xf32, #tpu.memory_space<vmem>>, vector<8x1xf32>
    %20 = vector.broadcast %19 : vector<8x1xf32> to vector<8x128xf32>
    %21 = arith.addf %18, %20 : vector<8x128xf32>
    %22 = arith.addf %21, %14 : vector<8x128xf32>
    %cst_19 = arith.constant 0.000000e+00 : f32
    %23 = vector.broadcast %cst_19 : f32 to vector<8x128xf32>
    %24 = arith.maximumf %22, %23 : vector<8x128xf32>
    %c0_20 = arith.constant 0 : index
    %c0_21 = arith.constant 0 : index
    %c0_22 = arith.constant 0 : index
    %25 = vector.load %arg9[%c0_20, %c0_21, %c0_22] : memref<1x8x128xf32, #tpu.memory_space<vmem>>, vector<1x8x128xf32>
    %26 = vector.shape_cast %25 : vector<1x8x128xf32> to vector<8x128xf32>
    %27 = vector.shape_cast %24 : vector<8x128xf32> to vector<1x8x128xf32>
    tpu.vector_store %arg9[%c0_20, %c0_21, %c0_22], %27 {strides = array<i32>} : memref<1x8x128xf32, #tpu.memory_space<vmem>>, vector<1x8x128xf32>,
    return
  }
  func.func @transform_0(%arg0: i32, %arg1: i32) -> (i32, i32, i32) {
    %c0_i32 = arith.constant 0 : i32
    %c0_i32_0 = arith.constant 0 : i32
    return %arg0, %c0_i32, %arg1 : i32, i32, i32
  }
  func.func @transform_1(%arg0: i32, %arg1: i32) -> (i32, i32, i32) {
    %c1_i32 = arith.constant 1 : i32
    %0 = arith.addi %arg1, %c1_i32 : i32
    %c1_i32_0 = arith.constant 1 : i32
    %1 = arith.muli %0, %c1_i32_0 : i32
    %c0_i32 = arith.constant 0 : i32
    %2 = arith.minsi %1, %c0_i32 : i32
    %c0_i32_1 = arith.constant 0 : i32
    %c0_i32_2 = arith.constant 0 : i32
    return %arg0, %c0_i32_1, %2 : i32, i32, i32
  }
  func.func @transform_2(%arg0: i32, %arg1: i32) -> (i32, i32) {
    %c0_i32 = arith.constant 0 : i32
    %c0_i32_0 = arith.constant 0 : i32
    %c0_i32_1 = arith.constant 0 : i32
    return %c0_i32, %c0_i32_0 : i32, i32
  }
  func.func @transform_3(%arg0: i32, %arg1: i32) -> (i32, i32) {
    %c0_i32 = arith.constant 0 : i32
    %c0_i32_0 = arith.constant 0 : i32
    %c0_i32_1 = arith.constant 0 : i32
    return %c0_i32, %c0_i32_0 : i32, i32
  }
  func.func @transform_4(%arg0: i32, %arg1: i32) -> (i32, i32) {
    %c0_i32 = arith.constant 0 : i32
    %c0_i32_0 = arith.constant 0 : i32
    %c0_i32_1 = arith.constant 0 : i32
    return %c0_i32, %c0_i32_0 : i32, i32
  }
  func.func @transform_5(%arg0: i32, %arg1: i32) -> (i32, i32) {
    %c0_i32 = arith.constant 0 : i32
    %c0_i32_0 = arith.constant 0 : i32
    %c0_i32_1 = arith.constant 0 : i32
    return %c0_i32, %c0_i32_0 : i32, i32
  }
  func.func @transform_6(%arg0: i32, %arg1: i32) -> (i32, i32) {
    %c0_i32 = arith.constant 0 : i32
    %c0_i32_0 = arith.constant 0 : i32
    %c0_i32_1 = arith.constant 0 : i32
    return %c0_i32, %c0_i32_0 : i32, i32
  }
  func.func @transform_7(%arg0: i32, %arg1: i32) -> (i32, i32, i32) {
    %c0_i32 = arith.constant 0 : i32
    %c0_i32_0 = arith.constant 0 : i32
    return %arg0, %c0_i32, %arg1 : i32, i32, i32
  }
}

</mosaic_0001>

<llo_original>
// kernel: tpu_custom_call.1
$region0: #{tpu_custom_call.1}
  #allocation0 [shape = 'u32[]', space=smem, size = 0x4, offset = 0x4, fixed_abs, tag = 'smem constant byte address 0x4 - core index']
  #allocation1 [shape = 'u32[144,128]{1,0:T(1,128)}', space=vmem, size = 0x12000, scoped, tag = 'internal scratch']
  %s0 = inlined_call_operand.vmem [shape: f32[2,4,16], index: 0, kind: input, shape index: {}]
  %s1 = inlined_call_operand.vmem [shape: f32[2,4,16], index: 1, kind: input, shape index: {}]
  %s2 = inlined_call_operand.vmem [shape: f32[8,4], index: 2, kind: input, shape index: {}]
  %s3 = inlined_call_operand.vmem [shape: f32[8,4], index: 3, kind: input, shape index: {}]
  %s4 = inlined_call_operand.vmem [shape: f32[8,1], index: 4, kind: input, shape index: {}]
  %s5 = inlined_call_operand.vmem [shape: f32[8,8], index: 5, kind: input, shape index: {}]
  %s6 = inlined_call_operand.vmem [shape: f32[8,1], index: 6, kind: input, shape index: {}]
  %s7 = inlined_call_operand.hbm [shape: f32[2,8,14], index: 7, kind: output, shape index: {}]
  %s8 = sld [smem:[#allocation0]]
  $region61: #{tpu_custom_call.1} parent=0
    _
  %s10 = ssub.s32 1, %s8
  %s11 = scalar_select 0, %s10, %s8
  $region1: #{tpu_custom_call.1} parent=0
    #allocation2 [shape = 'u8[8192]{0}', space=vmem, size = 0x2000, scoped, tag = 'output window, operand 0']
    #allocation3 [shape = 's32[2]{0}', space=sflag, size = 0x8, scoped, tag = 'scoped memory for tpu_custom_call.1']
    %12 = vsyncpa [#allocation3], 0
    %s13 = scalar_lea.sflag [#allocation3], 1
    %14 = vsyncpa %s13, 0
    loop: start=0, step=1, limit=4
    $region2: #{tpu_custom_call.1} parent=1 // loop_pre_header
      _
    $region3: #{tpu_custom_call.1} parent=1 // loop_header
      %s16 = sphi 0, %s20
      %p17 = scmp.ge.s32.totalorder %s16, 4
      %s23 = sphi 0, %s35
      %s24 = sphi 0, %s31
      %s25 = sphi 0, %s23
      %s26 = sphi 0, %s24
      %s27 = sphi 0, %s25
      %s28 = sphi 0, %s26
      %s40 = sphi 0, %s42
      %s43 = sphi 0, %s40
      %s44 = sphi 0, %s43
      %s60 = sphi 0, %s44
      %s74 = sphi 0, %s76
      %s77 = sphi 0, %s74
      %s78 = sphi 0, %s77
      %s94 = sphi 0, %s78
      %s98 = sphi 0, %s98
      %s100 = sphi 0, %s98
      %s101 = sphi 0, %s100
      %s115 = sphi 0, %s101
      %s119 = sphi 0, %s119
      %s121 = sphi 0, %s119
      %s122 = sphi 0, %s121
      %s136 = sphi 0, %s122
      %s140 = sphi 0, %s140
      %s142 = sphi 0, %s140
      %s143 = sphi 0, %s142
      %s157 = sphi 0, %s143
      %s161 = sphi 0, %s161
      %s163 = sphi 0, %s161
      %s164 = sphi 0, %s163
      %s178 = sphi 0, %s164
      %s182 = sphi 0, %s182
      %s184 = sphi 0, %s182
      %s185 = sphi 0, %s184
      %s199 = sphi 0, %s185
      %s207 = sphi 0, %s209
      %s210 = sphi 0, %s207
      %s211 = sphi 0, %s210
      %s227 = sphi 0, %s211
    $region4: #{tpu_custom_call.1} parent=1 // loop_header_branch
      %19 = sbr.rel (%p17) target = $region8
    $region5: #{tpu_custom_call.1} parent=1 // loop_body
      %s21 = ssub.s32 %s16, 1
      %s22 = ssub.s32 %s16, 2
      %s29 = sadd.s32 1, %s24
      %p30 = scmp.ge.s32.totalorder %s29, 1
      %s31 = scalar_select %p30, 0, %s29
      %s32 = sadd.s32 1, %s23
      %s33 = scalar_select %p30, %s32, %s23
      %p34 = scmp.ge.s32.totalorder %s33, 2
      %s35 = scalar_select %p34, 0, %s33
      %s36 = ssub.s32 %s23, %s35
      %s37 = ssub.s32 %s24, %s31
      %s38 = sor.u32 %s36, %s37
      %p39 = scmp.eq.s32.totalorder %s38, 0
      %s41 = sadd.s32 %s40, 1
      %s42 = scalar_select %p39, %s40, %s41
      %p45 = pneg %p39
      %p46 = scmp.eq.s32.totalorder %s16, 1
      %p47 = por %p45, %p46
      %p48 = scmp.ne.s32.totalorder %s40, %s43
      %p49 = scmp.eq.s32.totalorder %s16, 0
      %p50 = por %p48, %p49
      %p51 = scmp.ne.s32.totalorder %s40, %s43
      %p52 = scmp.eq.s32.totalorder %s21, 1
      %p53 = por %p51, %p52
      %p54 = scmp.ne.s32.totalorder %s43, %s44
      %p55 = scmp.eq.s32.totalorder %s21, 0
      %p56 = por %p54, %p55
      %p57 = scmp.ne.s32.totalorder %s43, %s44
      %p58 = scmp.eq.s32.totalorder %s22, 1
      %p59 = por %p57, %p58
      %p61 = scmp.ne.s32.totalorder %s44, %s60
      %p62 = scmp.eq.s32.totalorder %s22, 0
      %p63 = por %p61, %p62
      %s64 = sadd.s32 %s24, 1
      %p65 = scmp.lt.s32.totalorder %s64, 0
      %s66 = scalar_select %p65, %s64, 0
      %s67 = sadd.s32 %s31, 1
      %p68 = scmp.lt.s32.totalorder %s67, 0
      %s69 = scalar_select %p68, %s67, 0
      %s70 = ssub.s32 %s23, %s35
      %s71 = ssub.s32 %s66, %s69
      %s72 = sor.u32 %s70, %s71
      %p73 = scmp.eq.s32.totalorder %s72, 0
      %s75 = sadd.s32 %s74, 1
      %s76 = scalar_select %p73, %s74, %s75
      %p79 = pneg %p73
      %p80 = scmp.eq.s32.totalorder %s16, 1
      %p81 = por %p79, %p80
      %p82 = scmp.ne.s32.totalorder %s74, %s77
      %p83 = scmp.eq.s32.totalorder %s16, 0
      %p84 = por %p82, %p83
      %p85 = scmp.ne.s32.totalorder %s74, %s77
      %p86 = scmp.eq.s32.totalorder %s21, 1
      %p87 = por %p85, %p86
      %p88 = scmp.ne.s32.totalorder %s77, %s78
      %p89 = scmp.eq.s32.totalorder %s21, 0
      %p90 = por %p88, %p89
      %p91 = scmp.ne.s32.totalorder %s77, %s78
      %p92 = scmp.eq.s32.totalorder %s22, 1
      %p93 = por %p91, %p92
      %p95 = scmp.ne.s32.totalorder %s78, %s94
      %p96 = scmp.eq.s32.totalorder %s22, 0
      %p97 = por %p95, %p96
      %s99 = sadd.s32 %s98, 1
      %p102 = scmp.eq.s32.totalorder %s16, 1
      %p103 = scmp.ne.s32.totalorder %s98, %s100
      %p104 = scmp.eq.s32.totalorder %s16, 0
      %p105 = por %p103, %p104
      %p106 = scmp.ne.s32.totalorder %s98, %s100
      %p107 = scmp.eq.s32.totalorder %s21, 1
      %p108 = por %p106, %p107
      %p109 = scmp.ne.s32.totalorder %s100, %s101
      %p110 = scmp.eq.s32.totalorder %s21, 0
      %p111 = por %p109, %p110
      %p112 = scmp.ne.s32.totalorder %s100, %s101
      %p113 = scmp.eq.s32.totalorder %s22, 1
      %p114 = por %p112, %p113
      %p116 = scmp.ne.s32.totalorder %s101, %s115
      %p117 = scmp.eq.s32.totalorder %s22, 0
      %p118 = por %p116, %p117
      %s120 = sadd.s32 %s119, 1
      %p123 = scmp.eq.s32.totalorder %s16, 1
      %p124 = scmp.ne.s32.totalorder %s119, %s121
      %p125 = scmp.eq.s32.totalorder %s16, 0
      %p126 = por %p124, %p125
      %p127 = scmp.ne.s32.totalorder %s119, %s121
      %p128 = scmp.eq.s32.totalorder %s21, 1
      %p129 = por %p127, %p128
      %p130 = scmp.ne.s32.totalorder %s121, %s122
      %p131 = scmp.eq.s32.totalorder %s21, 0
      %p132 = por %p130, %p131
      %p133 = scmp.ne.s32.totalorder %s121, %s122
      %p134 = scmp.eq.s32.totalorder %s22, 1
      %p135 = por %p133, %p134
      %p137 = scmp.ne.s32.totalorder %s122, %s136
      %p138 = scmp.eq.s32.totalorder %s22, 0
      %p139 = por %p137, %p138
      %s141 = sadd.s32 %s140, 1
      %p144 = scmp.eq.s32.totalorder %s16, 1
      %p145 = scmp.ne.s32.totalorder %s140, %s142
      %p146 = scmp.eq.s32.totalorder %s16, 0
      %p147 = por %p145, %p146
      %p148 = scmp.ne.s32.totalorder %s140, %s142
      %p149 = scmp.eq.s32.totalorder %s21, 1
      %p150 = por %p148, %p149
      %p151 = scmp.ne.s32.totalorder %s142, %s143
      %p152 = scmp.eq.s32.totalorder %s21, 0
      %p153 = por %p151, %p152
      %p154 = scmp.ne.s32.totalorder %s142, %s143
      %p155 = scmp.eq.s32.totalorder %s22, 1
      %p156 = por %p154, %p155
      %p158 = scmp.ne.s32.totalorder %s143, %s157
      %p159 = scmp.eq.s32.totalorder %s22, 0
      %p160 = por %p158, %p159
      %s162 = sadd.s32 %s161, 1
      %p165 = scmp.eq.s32.totalorder %s16, 1
      %p166 = scmp.ne.s32.totalorder %s161, %s163
      %p167 = scmp.eq.s32.totalorder %s16, 0
      %p168 = por %p166, %p167
      %p169 = scmp.ne.s32.totalorder %s161, %s163
      %p170 = scmp.eq.s32.totalorder %s21, 1
      %p171 = por %p169, %p170
      %p172 = scmp.ne.s32.totalorder %s163, %s164
      %p173 = scmp.eq.s32.totalorder %s21, 0
      %p174 = por %p172, %p173
      %p175 = scmp.ne.s32.totalorder %s163, %s164
      %p176 = scmp.eq.s32.totalorder %s22, 1
      %p177 = por %p175, %p176
      %p179 = scmp.ne.s32.totalorder %s164, %s178
      %p180 = scmp.eq.s32.totalorder %s22, 0
      %p181 = por %p179, %p180
      %s183 = sadd.s32 %s182, 1
      %p186 = scmp.eq.s32.totalorder %s16, 1
      %p187 = scmp.ne.s32.totalorder %s182, %s184
      %p188 = scmp.eq.s32.totalorder %s16, 0
      %p189 = por %p187, %p188
      %p190 = scmp.ne.s32.totalorder %s182, %s184
      %p191 = scmp.eq.s32.totalorder %s21, 1
      %p192 = por %p190, %p191
      %p193 = scmp.ne.s32.totalorder %s184, %s185
      %p194 = scmp.eq.s32.totalorder %s21, 0
      %p195 = por %p193, %p194
      %p196 = scmp.ne.s32.totalorder %s184, %s185
      %p197 = scmp.eq.s32.totalorder %s22, 1
      %p198 = por %p196, %p197
      %p200 = scmp.ne.s32.totalorder %s185, %s199
      %p201 = scmp.eq.s32.totalorder %s22, 0
      %p202 = por %p200, %p201
      %s203 = ssub.s32 %s23, %s35
      %s204 = ssub.s32 %s24, %s31
      %s205 = sor.u32 %s203, %s204
      %p206 = scmp.eq.s32.totalorder %s205, 0
      %s208 = sadd.s32 %s207, 1
      %s209 = scalar_select %p206, %s207, %s208
      %p212 = pneg %p206
      %p213 = scmp.eq.s32.totalorder %s16, 1
      %p214 = por %p212, %p213
      %p215 = scmp.ne.s32.totalorder %s207, %s210
      %p216 = scmp.eq.s32.totalorder %s16, 0
      %p217 = por %p215, %p216
      %p218 = scmp.ne.s32.totalorder %s207, %s210
      %p219 = scmp.eq.s32.totalorder %s21, 1
      %p220 = por %p218, %p219
      %p221 = scmp.ne.s32.totalorder %s210, %s211
      %p222 = scmp.eq.s32.totalorder %s21, 0
      %p223 = por %p221, %p222
      %p224 = scmp.ne.s32.totalorder %s210, %s211
      %p225 = scmp.eq.s32.totalorder %s22, 1
      %p226 = por %p224, %p225
      %p228 = scmp.ne.s32.totalorder %s211, %s227
      %p229 = scmp.eq.s32.totalorder %s22, 0
      %p230 = por %p228, %p229
      %p231 = scmp.le.s32.totalorder 1, %s16
      %p232 = scmp.lt.s32.totalorder %s16, 3
      %p233 = pnand %p231, %p232
      %p234 = pneg %p233
      // Predicated region
      $region9: #{tpu_custom_call.1} parent=5 // pred_check
        _
      $region10: #{tpu_custom_call.1} parent=5 // pred_check_branch
        %236 = sbr.rel (%p233) target = $region12
      $region11: #{tpu_custom_call.1} parent=5 // pred_region
        %s237 = ssub.s32 %s16, 1
        // Predicated region
        $region13: #{tpu_custom_call.1} parent=11 // pred_check
          %p238 = pneg %p111
        $region14: #{tpu_custom_call.1} parent=11 // pred_check_branch
          %240 = sbr.rel (%p238) target = $region16
        $region15: #{tpu_custom_call.1} parent=11 // pred_region
          _
        $region16: #{tpu_custom_call.1} parent=11 // pred_fallthru
          _
        // Predicated region
        $region17: #{tpu_custom_call.1} parent=11 // pred_check
          %p241 = pneg %p132
        $region18: #{tpu_custom_call.1} parent=11 // pred_check_branch
          %243 = sbr.rel (%p241) target = $region20
        $region19: #{tpu_custom_call.1} parent=11 // pred_region
          _
        $region20: #{tpu_custom_call.1} parent=11 // pred_fallthru
          _
        // Predicated region
        $region21: #{tpu_custom_call.1} parent=11 // pred_check
          %p244 = pneg %p153
        $region22: #{tpu_custom_call.1} parent=11 // pred_check_branch
          %246 = sbr.rel (%p244) target = $region24
        $region23: #{tpu_custom_call.1} parent=11 // pred_region
          _
        $region24: #{tpu_custom_call.1} parent=11 // pred_fallthru
          _
        // Predicated region
        $region25: #{tpu_custom_call.1} parent=11 // pred_check
          %p247 = pneg %p174
        $region26: #{tpu_custom_call.1} parent=11 // pred_check_branch
          %249 = sbr.rel (%p247) target = $region28
        $region27: #{tpu_custom_call.1} parent=11 // pred_region
          _
        $region28: #{tpu_custom_call.1} parent=11 // pred_fallthru
          _
        // Predicated region
        $region29: #{tpu_custom_call.1} parent=11 // pred_check
          %p250 = pneg %p195
        $region30: #{tpu_custom_call.1} parent=11 // pred_check_branch
          %252 = sbr.rel (%p250) target = $region32
        $region31: #{tpu_custom_call.1} parent=11 // pred_region
          _
        $region32: #{tpu_custom_call.1} parent=11 // pred_fallthru
          _
      $region12: #{tpu_custom_call.1} parent=5 // pred_fallthru
        _
      %p253 = scmp.lt.s32.totalorder %s16, 2
      // Predicated region
      $region33: #{tpu_custom_call.1} parent=5 // pred_check
        %p254 = pneg %p253
      $region34: #{tpu_custom_call.1} parent=5 // pred_check_branch
        %256 = sbr.rel (%p254) target = $region36
      $region35: #{tpu_custom_call.1} parent=5 // pred_region
        // Predicated region
        $region37: #{tpu_custom_call.1} parent=35 // pred_check
          %p257 = pneg %p50
        $region38: #{tpu_custom_call.1} parent=35 // pred_check_branch
          %259 = sbr.rel (%p257) target = $region40
        $region39: #{tpu_custom_call.1} parent=35 // pred_region
          %p260 = scmp.lt.s32.totalorder %s23, 1
          %s261 = scalar_select %p260, %s23, 1
          %p262 = scmp.lt.s32.totalorder %s24, 0
          %s263 = scalar_select %p262, %s24, 0
          %s264 = sadd.s32 %s263, %s261
          %s265 = smul.addr %s264, 4
          %s266 = scalar_lea.vmem %s0, %s265
        $region40: #{tpu_custom_call.1} parent=35 // pred_fallthru
          _
        // Predicated region
        $region41: #{tpu_custom_call.1} parent=35 // pred_check
          %p267 = pneg %p84
        $region42: #{tpu_custom_call.1} parent=35 // pred_check_branch
          %269 = sbr.rel (%p267) target = $region44
        $region43: #{tpu_custom_call.1} parent=35 // pred_region
          %s270 = sadd.s32 %s24, 1
          %p271 = scmp.lt.s32.totalorder %s270, 0
          %s272 = scalar_select %p271, %s270, 0
          %p273 = scmp.lt.s32.totalorder %s23, 1
          %s274 = scalar_select %p273, %s23, 1
          %p275 = scmp.lt.s32.totalorder %s272, 0
          %s276 = scalar_select %p275, %s272, 0
          %s277 = sadd.s32 %s276, %s274
          %s278 = smul.addr %s277, 4
          %s279 = scalar_lea.vmem %s1, %s278
          %s280 = sadd.s32 %s24, 1
          %p281 = scmp.lt.s32.totalorder %s280, 0
          %s282 = scalar_select %p281, %s280, 0
        $region44: #{tpu_custom_call.1} parent=35 // pred_fallthru
          _
      $region36: #{tpu_custom_call.1} parent=5 // pred_fallthru
        _
      %p283 = scmp.le.s32.totalorder 1, %s16
      %p284 = scmp.lt.s32.totalorder %s16, 3
      %p285 = pnand %p283, %p284
      %p286 = pneg %p285
      // Predicated region
      $region45: #{tpu_custom_call.1} parent=5 // pred_check
        _
      $region46: #{tpu_custom_call.1} parent=5 // pred_check_branch
        %288 = sbr.rel (%p285) target = $region48
      $region47: #{tpu_custom_call.1} parent=5 // pred_region
        %s289 = ssub.s32 %s16, 1
        %p290 = scmp.lt.s32.totalorder %s25, 1
        %s291 = scalar_select %p290, %s25, 1
        %p292 = scmp.lt.s32.totalorder %s26, 0
        %s293 = scalar_select %p292, %s26, 0
        %s294 = sadd.s32 %s293, %s291
        %s295 = smul.addr %s294, 4
        %s296 = scalar_lea.vmem %s0, %s295
        %p297 = pneg %p56
        %p298 = pneg %p53
        %s299 = sadd.s32 %s26, 1
        %p300 = scmp.lt.s32.totalorder %s299, 0
        %s301 = scalar_select %p300, %s299, 0
        %p302 = scmp.lt.s32.totalorder %s25, 1
        %s303 = scalar_select %p302, %s25, 1
        %p304 = scmp.lt.s32.totalorder %s301, 0
        %s305 = scalar_select %p304, %s301, 0
        %s306 = sadd.s32 %s305, %s303
        %s307 = smul.addr %s306, 4
        %s308 = scalar_lea.vmem %s1, %s307
        %p309 = pneg %p90
        %p310 = pneg %p87
        %p311 = pneg %p111
        %p312 = pneg %p108
        %p313 = pneg %p132
        %p314 = pneg %p129
        %p315 = pneg %p153
        %p316 = pneg %p150
        %p317 = pneg %p174
        %p318 = pneg %p171
        %p319 = pneg %p195
        %p320 = pneg %p192
        %p321 = pneg %p223
        %p322 = pneg %p220
        %s323 = sand.u32 %s210, 1
        %s324 = scalar_lea.sflag [#allocation3], %s323
        %s325 = sand.u32 %s210, 1
        %s326 = smul.addr %s325, 8
        %s327 = scalar_lea.vmem [#allocation2], %s326
        %p328 = scmp.lt.s32.totalorder %s25, 1
        %s329 = scalar_select %p328, %s25, 1
        %p330 = scmp.lt.s32.totalorder %s26, 0
        %s331 = scalar_select %p330, %s26, 0
        %s332 = sadd.s32 %s331, %s329
        %s333 = smul.addr %s332, 4
        %s334 = scalar_lea.vmem %s0, %s333
        %s335 = sadd.s32 %s26, 1
        %p336 = scmp.lt.s32.totalorder %s335, 0
        %s337 = scalar_select %p336, %s335, 0
        %p338 = scmp.lt.s32.totalorder %s25, 1
        %s339 = scalar_select %p338, %s25, 1
        %p340 = scmp.lt.s32.totalorder %s337, 0
        %s341 = scalar_select %p340, %s337, 0
        %s342 = sadd.s32 %s341, %s339
        %s343 = smul.addr %s342, 4
        %s344 = scalar_lea.vmem %s1, %s343
        %s345 = sadd.s32 %s26, 1
        %p346 = scmp.lt.s32.totalorder %s345, 0
        %s347 = scalar_select %p346, %s345, 0
        %v348 = vld [vmem:[%s2] sm:$0xff]
        %v349 = vld [vmem:[%s3] sm:$0xff]
        %v350 = vld [vmem:[%s334] sm:$0xf]
        %v351 = vld [vmem:[%s344] sm:$0xf]
        %vm352 = vcmask 31744
        %v354 = vsel %vm352, %v349, 0
        %vm356 = vcmask 1043456
        %v358 = vsel %vm356, %v350, 0
        %360 = vmatprep.subr.mxu0 0.0
        %361 = vmatpush1.msra.mxu0 %v358
        %362 = vmatprep.subr.mxu0 0.0
        %363 = vmatpush1.msra.mxu0 0.0
        %364 = vmatprep.subr.mxu0 0.0
        %365 = vmatpush1.msra.mxu0 0.0
        %366 = vmatprep.subr.mxu0 0.0
        %367 = vmatpush1.msra.mxu0 0.0
        %368 = vmatprep.subr.mxu0 0.0
        %369 = vmatpush1.msra.mxu0 0.0
        %370 = vmatprep.subr.mxu0 0.0
        %371 = vmatpush1.msra.mxu0 0.0
        %372 = vmatprep.subr.mxu0 0.0
        %373 = vmatpush1.msra.mxu0 0.0
        %374 = vmatprep.subr.mxu0 0.0
        %375 = vmatpush1.msra.mxu0 0.0
        %376 = vmatprep.subr.mxu0 0.0
        %377 = vmatpush1.msra.mxu0 0.0
        %378 = vmatprep.subr.mxu0 0.0
        %379 = vmatpush1.msra.mxu0 0.0
        %380 = vmatprep.subr.mxu0 0.0
        %381 = vmatpush1.msra.mxu0 0.0
        %382 = vmatprep.subr.mxu0 0.0
        %383 = vmatpush1.msra.mxu0 0.0
        %384 = vmatprep.subr.mxu0 0.0
        %385 = vmatpush1.msra.mxu0 0.0
        %386 = vmatprep.subr.mxu0 0.0
        %387 = vmatpush1.msra.mxu0 0.0
        %388 = vmatprep.subr.mxu0 0.0
        %389 = vmatpush1.msra.mxu0 0.0
        %390 = vmatprep.subr.mxu0 0.0
        %391 = vmatpush1.msra.mxu0 0.0
        %392 = vmatprep.subr.mxu0 0.0
        %393 = vmatpush1.msra.mxu0 0.0
        %394 = vmatprep.subr.mxu0 0.0
        %395 = vmatpush1.msra.mxu0 0.0
        %396 = vmatprep.subr.mxu0 0.0
        %397 = vmatpush1.msra.mxu0 0.0
        %398 = vmatprep.subr.mxu0 0.0
        %399 = vmatpush1.msra.mxu0 0.0
        %400 = vmatprep.subr.mxu0 0.0
        %401 = vmatpush1.msra.mxu0 0.0
        %402 = vmatprep.subr.mxu0 0.0
        %403 = vmatpush1.msra.mxu0 0.0
        %404 = vmatprep.subr.mxu0 0.0
        %405 = vmatpush1.msra.mxu0 0.0
        %406 = vmatprep.subr.mxu0 0.0
        %407 = vmatpush1.msra.mxu0 0.0
        %408 = vmatprep.subr.mxu0 0.0
        %409 = vmatpush1.msra.mxu0 0.0
        %410 = vmatprep.subr.mxu0 0.0
        %411 = vmatpush1.msra.mxu0 0.0
        %412 = vmatprep.subr.mxu0 0.0
        %413 = vmatpush1.msra.mxu0 0.0
        %414 = vmatprep.subr.mxu0 0.0
        %415 = vmatpush1.msra.mxu0 0.0
        %416 = vmatprep.subr.mxu0 0.0
        %417 = vmatpush1.msra.mxu0 0.0
        %418 = vmatprep.subr.mxu0 0.0
        %419 = vmatpush1.msra.mxu0 0.0
        %420 = vmatprep.subr.mxu0 0.0
        %421 = vmatpush1.msra.mxu0 0.0
        %422 = vmatprep.subr.mxu0 0.0
        %423 = vmatpush1.msra.mxu0 0.0
        %424 = vmatprep.mubr.f32.mxu0 0.0
        %425 = vmatmul.mubr.f32.gmra.mrb[0].mxu0 %v354
        %v426 = vpop.f32.mrb[0].mxu0
        %v427 = vadd.f32 0.0, %v426
        %v428 = vpop.f32.mrb[0].mxu0
        %429 = vdwg.mxu0
        %v431 = vsel %vm356, %v351, 0
        %433 = vmatprep.subr.mxu0 0.0
        %434 = vmatpush1.msra.mxu0 %v431
        %435 = vmatprep.subr.mxu0 0.0
        %436 = vmatpush1.msra.mxu0 0.0
        %437 = vmatprep.subr.mxu0 0.0
        %438 = vmatpush1.msra.mxu0 0.0
        %439 = vmatprep.subr.mxu0 0.0
        %440 = vmatpush1.msra.mxu0 0.0
        %441 = vmatprep.subr.mxu0 0.0
        %442 = vmatpush1.msra.mxu0 0.0
        %443 = vmatprep.subr.mxu0 0.0
        %444 = vmatpush1.msra.mxu0 0.0
        %445 = vmatprep.subr.mxu0 0.0
        %446 = vmatpush1.msra.mxu0 0.0
        %447 = vmatprep.subr.mxu0 0.0
        %448 = vmatpush1.msra.mxu0 0.0
        %449 = vmatprep.subr.mxu0 0.0
        %450 = vmatpush1.msra.mxu0 0.0
        %451 = vmatprep.subr.mxu0 0.0
        %452 = vmatpush1.msra.mxu0 0.0
        %453 = vmatprep.subr.mxu0 0.0
        %454 = vmatpush1.msra.mxu0 0.0
        %455 = vmatprep.subr.mxu0 0.0
        %456 = vmatpush1.msra.mxu0 0.0
        %457 = vmatprep.subr.mxu0 0.0
        %458 = vmatpush1.msra.mxu0 0.0
        %459 = vmatprep.subr.mxu0 0.0
        %460 = vmatpush1.msra.mxu0 0.0
        %461 = vmatprep.subr.mxu0 0.0
        %462 = vmatpush1.msra.mxu0 0.0
        %463 = vmatprep.subr.mxu0 0.0
        %464 = vmatpush1.msra.mxu0 0.0
        %465 = vmatprep.subr.mxu0 0.0
        %466 = vmatpush1.msra.mxu0 0.0
        %467 = vmatprep.subr.mxu0 0.0
        %468 = vmatpush1.msra.mxu0 0.0
        %469 = vmatprep.subr.mxu0 0.0
        %470 = vmatpush1.msra.mxu0 0.0
        %471 = vmatprep.subr.mxu0 0.0
        %472 = vmatpush1.msra.mxu0 0.0
        %473 = vmatprep.subr.mxu0 0.0
        %474 = vmatpush1.msra.mxu0 0.0
        %475 = vmatprep.subr.mxu0 0.0
        %476 = vmatpush1.msra.mxu0 0.0
        %477 = vmatprep.subr.mxu0 0.0
        %478 = vmatpush1.msra.mxu0 0.0
        %479 = vmatprep.subr.mxu0 0.0
        %480 = vmatpush1.msra.mxu0 0.0
        %481 = vmatprep.subr.mxu0 0.0
        %482 = vmatpush1.msra.mxu0 0.0
        %483 = vmatprep.subr.mxu0 0.0
        %484 = vmatpush1.msra.mxu0 0.0
        %485 = vmatprep.subr.mxu0 0.0
        %486 = vmatpush1.msra.mxu0 0.0
        %487 = vmatprep.subr.mxu0 0.0
        %488 = vmatpush1.msra.mxu0 0.0
        %489 = vmatprep.subr.mxu0 0.0
        %490 = vmatpush1.msra.mxu0 0.0
        %491 = vmatprep.subr.mxu0 0.0
        %492 = vmatpush1.msra.mxu0 0.0
        %493 = vmatprep.subr.mxu0 0.0
        %494 = vmatpush1.msra.mxu0 0.0
        %495 = vmatprep.subr.mxu0 0.0
        %496 = vmatpush1.msra.mxu0 0.0
        %497 = vmatprep.mubr.f32.mxu0 0.0
        %498 = vmatmul.mubr.f32.gmra.mrb[0].mxu0 %v354
        %v499 = vpop.f32.mrb[0].mxu0
        %v500 = vadd.f32 0.0, %v499
        %v501 = vpop.f32.mrb[0].mxu0
        %502 = vdwg.mxu0
        %505 = vrot.lane.b32.xlu0 %v427, 126
        %v506 = vpop.permute.xlu0 %505
        %507 = vrot.lane.b32.xlu0 %v500, 126
        %v508 = vpop.permute.xlu0 %507
        %vm509 = vcmask 1031168
        %v510 = vsel %vm509, %v506, %v508
        %v513 = vsel %vm352, %v348, 0
        %515 = vmatprep.subr.mxu0 0.0
        %516 = vmatpush1.msra.mxu0 %v358
        %517 = vmatprep.subr.mxu0 0.0
        %518 = vmatpush1.msra.mxu0 0.0
        %519 = vmatprep.subr.mxu0 0.0
        %520 = vmatpush1.msra.mxu0 0.0
        %521 = vmatprep.subr.mxu0 0.0
        %522 = vmatpush1.msra.mxu0 0.0
        %523 = vmatprep.subr.mxu0 0.0
        %524 = vmatpush1.msra.mxu0 0.0
        %525 = vmatprep.subr.mxu0 0.0
        %526 = vmatpush1.msra.mxu0 0.0
        %527 = vmatprep.subr.mxu0 0.0
        %528 = vmatpush1.msra.mxu0 0.0
        %529 = vmatprep.subr.mxu0 0.0
        %530 = vmatpush1.msra.mxu0 0.0
        %531 = vmatprep.subr.mxu0 0.0
        %532 = vmatpush1.msra.mxu0 0.0
        %533 = vmatprep.subr.mxu0 0.0
        %534 = vmatpush1.msra.mxu0 0.0
        %535 = vmatprep.subr.mxu0 0.0
        %536 = vmatpush1.msra.mxu0 0.0
        %537 = vmatprep.subr.mxu0 0.0
        %538 = vmatpush1.msra.mxu0 0.0
        %539 = vmatprep.subr.mxu0 0.0
        %540 = vmatpush1.msra.mxu0 0.0
        %541 = vmatprep.subr.mxu0 0.0
        %542 = vmatpush1.msra.mxu0 0.0
        %543 = vmatprep.subr.mxu0 0.0
        %544 = vmatpush1.msra.mxu0 0.0
        %545 = vmatprep.subr.mxu0 0.0
        %546 = vmatpush1.msra.mxu0 0.0
        %547 = vmatprep.subr.mxu0 0.0
        %548 = vmatpush1.msra.mxu0 0.0
        %549 = vmatprep.subr.mxu0 0.0
        %550 = vmatpush1.msra.mxu0 0.0
        %551 = vmatprep.subr.mxu0 0.0
        %552 = vmatpush1.msra.mxu0 0.0
        %553 = vmatprep.subr.mxu0 0.0
        %554 = vmatpush1.msra.mxu0 0.0
        %555 = vmatprep.subr.mxu0 0.0
        %556 = vmatpush1.msra.mxu0 0.0
        %557 = vmatprep.subr.mxu0 0.0
        %558 = vmatpush1.msra.mxu0 0.0
        %559 = vmatprep.subr.mxu0 0.0
        %560 = vmatpush1.msra.mxu0 0.0
        %561 = vmatprep.subr.mxu0 0.0
        %562 = vmatpush1.msra.mxu0 0.0
        %563 = vmatprep.subr.mxu0 0.0
        %564 = vmatpush1.msra.mxu0 0.0
        %565 = vmatprep.subr.mxu0 0.0
        %566 = vmatpush1.msra.mxu0 0.0
        %567 = vmatprep.subr.mxu0 0.0
        %568 = vmatpush1.msra.mxu0 0.0
        %569 = vmatprep.subr.mxu0 0.0
        %570 = vmatpush1.msra.mxu0 0.0
        %571 = vmatprep.subr.mxu0 0.0
        %572 = vmatpush1.msra.mxu0 0.0
        %573 = vmatprep.subr.mxu0 0.0
        %574 = vmatpush1.msra.mxu0 0.0
        %575 = vmatprep.subr.mxu0 0.0
        %576 = vmatpush1.msra.mxu0 0.0
        %577 = vmatprep.subr.mxu0 0.0
        %578 = vmatpush1.msra.mxu0 0.0
        %579 = vmatprep.mubr.f32.mxu0 0.0
        %580 = vmatmul.mubr.f32.gmra.mrb[0].mxu0 %v513
        %v581 = vpop.f32.mrb[0].mxu0
        %v582 = vadd.f32 %v510, %v581
        %v583 = vpop.f32.mrb[0].mxu0
        %584 = vdwg.mxu0
        %v585 = vld [vmem:[%s4] sm:$0xff]
        %587 = vset.pattern.permute.xlu0 0
        %588 = vperm.xlu0 %587, %v585
        %v589 = vpop.permute.xlu0 %588
        %v591 = vadd.f32 %v582, %v589
        %v592 = vmax.f32 %v591, 0.0
        %v593 = vld [vmem:[%s5] sm:$0xff]
        %v594 = vld [vmem:[%s6] sm:$0xff]
        %596 = vset.pattern.permute.xlu0 0
        %597 = vperm.xlu0 %596, %v594
        %v598 = vpop.permute.xlu0 %597
        %vm600 = vcmask 64512
        %v602 = vsel %vm600, %v593, 0
        %604 = vmatprep.subr.mxu0 0.0
        %605 = vmatpush1.msra.mxu0 %v592
        %606 = vmatprep.subr.mxu0 0.0
        %607 = vmatpush1.msra.mxu0 0.0
        %608 = vmatprep.subr.mxu0 0.0
        %609 = vmatpush1.msra.mxu0 0.0
        %610 = vmatprep.subr.mxu0 0.0
        %611 = vmatpush1.msra.mxu0 0.0
        %612 = vmatprep.subr.mxu0 0.0
        %613 = vmatpush1.msra.mxu0 0.0
        %614 = vmatprep.subr.mxu0 0.0
        %615 = vmatpush1.msra.mxu0 0.0
        %616 = vmatprep.subr.mxu0 0.0
        %617 = vmatpush1.msra.mxu0 0.0
        %618 = vmatprep.subr.mxu0 0.0
        %619 = vmatpush1.msra.mxu0 0.0
        %620 = vmatprep.subr.mxu0 0.0
        %621 = vmatpush1.msra.mxu0 0.0
        %622 = vmatprep.subr.mxu0 0.0
        %623 = vmatpush1.msra.mxu0 0.0
        %624 = vmatprep.subr.mxu0 0.0
        %625 = vmatpush1.msra.mxu0 0.0
        %626 = vmatprep.subr.mxu0 0.0
        %627 = vmatpush1.msra.mxu0 0.0
        %628 = vmatprep.subr.mxu0 0.0
        %629 = vmatpush1.msra.mxu0 0.0
        %630 = vmatprep.subr.mxu0 0.0
        %631 = vmatpush1.msra.mxu0 0.0
        %632 = vmatprep.subr.mxu0 0.0
        %633 = vmatpush1.msra.mxu0 0.0
        %634 = vmatprep.subr.mxu0 0.0
        %635 = vmatpush1.msra.mxu0 0.0
        %636 = vmatprep.subr.mxu0 0.0
        %637 = vmatpush1.msra.mxu0 0.0
        %638 = vmatprep.subr.mxu0 0.0
        %639 = vmatpush1.msra.mxu0 0.0
        %640 = vmatprep.subr.mxu0 0.0
        %641 = vmatpush1.msra.mxu0 0.0
        %642 = vmatprep.subr.mxu0 0.0
        %643 = vmatpush1.msra.mxu0 0.0
        %644 = vmatprep.subr.mxu0 0.0
        %645 = vmatpush1.msra.mxu0 0.0
        %646 = vmatprep.subr.mxu0 0.0
        %647 = vmatpush1.msra.mxu0 0.0
        %648 = vmatprep.subr.mxu0 0.0
        %649 = vmatpush1.msra.mxu0 0.0
        %650 = vmatprep.subr.mxu0 0.0
        %651 = vmatpush1.msra.mxu0 0.0
        %652 = vmatprep.subr.mxu0 0.0
        %653 = vmatpush1.msra.mxu0 0.0
        %654 = vmatprep.subr.mxu0 0.0
        %655 = vmatpush1.msra.mxu0 0.0
        %656 = vmatprep.subr.mxu0 0.0
        %657 = vmatpush1.msra.mxu0 0.0
        %658 = vmatprep.subr.mxu0 0.0
        %659 = vmatpush1.msra.mxu0 0.0
        %660 = vmatprep.subr.mxu0 0.0
        %661 = vmatpush1.msra.mxu0 0.0
        %662 = vmatprep.subr.mxu0 0.0
        %663 = vmatpush1.msra.mxu0 0.0
        %664 = vmatprep.subr.mxu0 0.0
        %665 = vmatpush1.msra.mxu0 0.0
        %666 = vmatprep.subr.mxu0 0.0
        %667 = vmatpush1.msra.mxu0 0.0
        %668 = vmatprep.mubr.f32.mxu0 0.0
        %669 = vmatmul.mubr.f32.gmra.mrb[0].mxu0 %v602
        %v670 = vpop.f32.mrb[0].mxu0
        %v671 = vadd.f32 %v598, %v670
        %v672 = vpop.f32.mrb[0].mxu0
        %673 = vdwg.mxu0
        %v674 = vadd.f32 %v671, %v591
        %v675 = vmax.f32 %v674, 0.0
        %676 = vst [vmem:[%s327] sm:$0xff] %v675
        %s677 = sand.u32 %s210, 1
        %s678 = scalar_lea.sflag [#allocation3], %s677
        %s679 = sand.u32 %s210, 1
        %s680 = smul.addr %s679, 8
        %s681 = scalar_lea.vmem [#allocation2], %s680
        // Predicated region
        $region49: #{tpu_custom_call.1} parent=47 // pred_check
          %p682 = pneg %p220
        $region50: #{tpu_custom_call.1} parent=47 // pred_check_branch
          %684 = sbr.rel (%p682) target = $region52
        $region51: #{tpu_custom_call.1} parent=47 // pred_region
          %s686 = ssub.s32 128, 128
          %687 = vsyncadd %s678, %s686
          %s688 = sadd.s32 %s26, %s25
          %s689 = smul.addr %s688, 128
          %s690 = scalar_lea.hbm %s7, %s689
          %s692 = sshll.u32 %s681, 4
          %s693 = int_to_ptr.vmem [resolvable:$true] %s692
          %695 = dma.vmem_to_hbm [thread:$0]  %s693, 128, %s690, %s678
        $region52: #{tpu_custom_call.1} parent=47 // pred_fallthru
          _
      $region48: #{tpu_custom_call.1} parent=5 // pred_fallthru
        _
      %p696 = scmp.le.s32.totalorder 2, %s16
      // Predicated region
      $region53: #{tpu_custom_call.1} parent=5 // pred_check
        %p697 = pneg %p696
      $region54: #{tpu_custom_call.1} parent=5 // pred_check_branch
        %699 = sbr.rel (%p697) target = $region56
      $region55: #{tpu_custom_call.1} parent=5 // pred_region
        %s700 = ssub.s32 %s16, 2
        // Predicated region
        $region57: #{tpu_custom_call.1} parent=55 // pred_check
          %p701 = pneg %p226
        $region58: #{tpu_custom_call.1} parent=55 // pred_check_branch
          %703 = sbr.rel (%p701) target = $region60
        $region59: #{tpu_custom_call.1} parent=55 // pred_region
          %s704 = sand.u32 %s211, 1
          %s705 = scalar_lea.sflag [#allocation3], %s704
          %s706 = sand.u32 %s211, 1
          %s707 = smul.addr %s706, 8
          %s708 = scalar_lea.vmem [#allocation2], %s707
          %709 = dma.done %s705, 128
        $region60: #{tpu_custom_call.1} parent=55 // pred_fallthru
          _
      $region56: #{tpu_custom_call.1} parent=5 // pred_fallthru
        _
    $region6: #{tpu_custom_call.1} parent=1 // loop_footer
      %s20 = sadd.s32 1, %s16
    $region7: #{tpu_custom_call.1} parent=1 // loop_footer_branch
      %15 = sbr.rel target = $region3
    $region8: #{tpu_custom_call.1} parent=1 // loop_exit
      _
    %710 = vsyncpa [#allocation3], 1
    %s711 = scalar_lea.sflag [#allocation3], 1
    %712 = vsyncpa %s711, 1

</llo_original>
